<compile_context>
chip_gen: v6e
topology: v6e:2x2x1
jax: 0.10.0
libtpu: 0.0.40
codegen_flags: <defaults>
</compile_context>

<pallas_src>
import functools

import jax
import jax.numpy as jnp
import numpy as np
from jax.experimental import pallas as pl
from jax.experimental.pallas import tpu as pltpu

EPS = 1e-5                     # InstanceNorm2d default eps
NEG_SLOPE = 0.2                # LeakyReLU slope
MATMUL_DTYPE = jnp.bfloat16    # MXU-native matmul operand width (accumulation stays f32)
Y_DTYPE = jnp.bfloat16         # conv intermediate in HBM (stats are taken in f32)
LANE = 128


# ------------------------------ JAX glue -------------------------------------

def _fold_input(x_nhwc):
    """(N,H,W,C) -> (N, HO*WO, 16*C) : full 4x4/stride-2 receptive field per output pixel.

    pad 1 -> space-to-depth(2) -> fold the 2x2 tap neighbourhood into the channel
    (contraction) axis.  The conv then becomes a single (rows, 16C) x (16C, Cout)
    matmul per tile, with no in-kernel shifted slices / concatenates / halos.
    """
    N, H, W, C = x_nhwc.shape
    assert H % 2 == 0 and W % 2 == 0
    HO, WO = H // 2, W // 2
    xp = jnp.pad(x_nhwc, ((0, 0), (1, 1), (1, 1), (0, 0)))
    Hp, Wp = H + 2, W + 2
    s = xp.reshape(N, Hp // 2, 2, Wp // 2, 2, C)            # (n, a, p, b, q, c)
    s = jnp.transpose(s, (0, 1, 3, 2, 4, 5))                # (n, a, b, p, q, c)
    s = s.reshape(N, Hp // 2, Wp // 2, 4 * C)               # s2d: (N, HO+1, WO+1, 4C)
    parts = [s[:, dy:dy + HO, dx:dx + WO, :] for dy in (0, 1) for dx in (0, 1)]
    folded = jnp.concatenate(parts, axis=-1)                # (N, HO, WO, 16C)
    return folded.reshape(N, HO * WO, 16 * C)


def _fold_weight(w_oihw):
    """PyTorch (Cout, Cin, 4, 4) -> (16*Cin, Cout), matching _fold_input channel order."""
    Cout, Cin, _, _ = w_oihw.shape
    w = w_oihw.reshape(Cout, Cin, 2, 2, 2, 2)               # (co, ci, dy, p, dx, q)
    w = jnp.transpose(w, (2, 4, 3, 5, 1, 0))                # (dy, dx, p, q, ci, co)
    return w.reshape(16 * Cin, Cout)


def _vmem_budget_bytes():
    """Generation-aware VMEM budget (fallback is safe for v7x's 64 MiB physical)."""
    try:
        cap = int(pltpu.get_tpu_info().vmem_capacity_bytes)
    except Exception:
        cap = 64 * 1024 * 1024
    return (cap * 3) // 4


def _pick_row_tile(HO, WO, K16, Cout, budget):
    """Largest row tile whose double-buffered working set fits the VMEM budget."""
    HW = HO * WO
    for th in range(HO, 0, -1):
        if HO % th:
            continue
        t2 = th * WO
        if t2 % 8 != 0 and t2 != HW:
            continue
        ws = (2 * (t2 * K16 * 2 + t2 * Cout * 2)    # dbl-buffered folded-in + bf16 y
              + 2 * K16 * Cout * 2                  # resident weights (counted x2)
              + 2 * 2 * Cout * 4)                   # stats tiles
        if ws <= budget:
            return th
    for th in range(1, HO + 1):                     # nothing fits: smallest aligned tile
        if HO % th == 0 and ((th * WO) % 8 == 0 or th * WO == HW):
            return th
    return HO


def _pick_lane_pack(Cout, WO, T2, HW):
    """Pack LP output pixels per 128-lane row for the elementwise pass when Cout < 128."""
    if Cout >= LANE or LANE % Cout != 0:
        return 1
    lp = LANE // Cout
    while lp > 1:
        if WO % lp == 0 and ((T2 // lp) % 8 == 0 or T2 == HW):
            return lp
        lp //= 2
    return 1


# ------------------------------ Pallas kernels -------------------------------

def _conv_stats_kernel(x_ref, w_ref, y_ref, st_ref):
    """Single folded-K MXU matmul + per-tile sum / sum-of-squares (f32)."""
    acc = jnp.dot(x_ref[0], w_ref[...], preferred_element_type=jnp.float32)  # (T2, Cout)
    y_ref[...] = acc.astype(y_ref.dtype)[None]
    s1 = jnp.sum(acc, axis=0, keepdims=True)
    s2 = jnp.sum(acc * acc, axis=0, keepdims=True)
    st_ref[...] = jnp.concatenate([s1, s2], axis=0)[None, None]              # (1,1,2,Cout)


def _norm_act_kernel(y_ref, sc_ref, sh_ref, o_ref):
    """Per-image precomputed scale/shift FMA + LeakyReLU(0.2), lane-packed layout."""
    z = y_ref[0].astype(jnp.float32) * sc_ref[0] + sh_ref[0]
    o_ref[...] = jnp.where(z >= 0.0, z, NEG_SLOPE * z)[None]


# ------------------------------ forward wrapper -------------------------------

def downblock_forward(x, params, *, row_tile=None):
    """x: (N, Cin, H, W) f32 NCHW -> (N, Cout, H//2, W//2) f32 NCHW.

    NOTE: NCHW<->NHWC transposes exist only to match the PyTorch interface;
    in a channels-last pipeline they would be dropped.
    """
    w, gamma, beta = params["w"], params["gamma"], params["beta"]
    N, Cin, H, W = x.shape
    Cout = w.shape[0]
    assert H % 2 == 0 and W % 2 == 0
    HO, WO = H // 2, W // 2
    HW = HO * WO
    K16 = 16 * Cin

    x_nhwc = jnp.transpose(x, (0, 2, 3, 1))
    folded = _fold_input(x_nhwc).astype(MATMUL_DTYPE)        # (N, HW, 16*Cin) bf16
    w_f = _fold_weight(w).astype(MATMUL_DTYPE)               # (16*Cin, Cout)  bf16

    budget = _vmem_budget_bytes()
    TH = _pick_row_tile(HO, WO, K16, Cout, budget) if row_tile is None else row_tile
    assert HO % TH == 0, "row_tile must divide H//2"
    T2 = TH * WO
    assert T2 % 8 == 0 or T2 == HW, "row tile * output width must be a multiple of 8"
    R = HW // T2
    vmem_limit = min(budget, 96 * 1024 * 1024)

    cparams = pltpu.CompilerParams(
        dimension_semantics=("parallel", "parallel"),
        vmem_limit_bytes=vmem_limit)

    # ---- pass 1: conv (one MXU matmul per tile) + per-tile stats -------------
    y, stats = pl.pallas_call(
        _conv_stats_kernel,
        out_shape=(jax.ShapeDtypeStruct((N, HW, Cout), Y_DTYPE),
                   jax.ShapeDtypeStruct((N, R, 2, Cout), jnp.float32)),
        grid=(N, R),
        in_specs=[
            pl.BlockSpec((1, T2, K16), lambda n, r: (n, r, 0)),
            pl.BlockSpec((K16, Cout), lambda n, r: (0, 0)),
        ],
        out_specs=(
            pl.BlockSpec((1, T2, Cout), lambda n, r: (n, r, 0)),
            pl.BlockSpec((1, 1, 2, Cout), lambda n, r: (n, r, 0, 0)),
        ),
        compiler_params=cparams,
    )(folded, w_f)

    # ---- tiny per-image finalisation: f32 stats -> per-channel scale / shift --
    ssum = jnp.sum(stats, axis=1)                             # (N, 2, Cout) f32
    mean = ssum[:, 0, :] / HW
    var = ssum[:, 1, :] / HW - mean * mean                    # biased var (InstanceNorm2d)
    inv_std = jax.lax.rsqrt(var + EPS)
    scale = inv_std * gamma[None, :].astype(jnp.float32)      # (N, Cout)
    shift = beta[None, :].astype(jnp.float32) - mean * scale  # (N, Cout)

    # ---- pass 2: y*scale + shift, LeakyReLU; lane-packed when Cout < 128 ------
    LP = _pick_lane_pack(Cout, WO, T2, HW)
    LC = LP * Cout
    TP = T2 // LP
    y_p = y.reshape(N, HW // LP, LC)                          # free reshape (glue)
    sc_p = jnp.tile(scale, (1, LP)).reshape(N, 1, LC)
    sh_p = jnp.tile(shift, (1, LP)).reshape(N, 1, LC)

    out = pl.pallas_call(
        _norm_act_kernel,
        out_shape=jax.ShapeDtypeStruct((N, HW // LP, LC), jnp.float32),
        grid=(N, R),
        in_specs=[
            pl.BlockSpec((1, TP, LC), lambda n, r: (n, r, 0)),
            pl.BlockSpec((1, 1, LC), lambda n, r: (n, 0, 0)),
            pl.BlockSpec((1, 1, LC), lambda n, r: (n, 0, 0)),
        ],
        out_specs=pl.BlockSpec((1, TP, LC), lambda n, r: (n, r, 0)),
        compiler_params=cparams,
    )(y_p, sc_p, sh_p)

    out = out.reshape(N, HO, WO, Cout)
    return jnp.transpose(out, (0, 3, 1, 2))


# ------------------------------ pure-JAX reference ----------------------------

def downblock_reference(x, params):
    w, gamma, beta = params["w"], params["gamma"], params["beta"]
    y = jax.lax.conv_general_dilated(
        x, w, window_strides=(2, 2), padding=((1, 1), (1, 1)),
        dimension_numbers=("NCHW", "OIHW", "NCHW"))
    mean = jnp.mean(y, axis=(2, 3), keepdims=True)
    var = jnp.mean((y - mean) ** 2, axis=(2, 3), keepdims=True)
    yn = (y - mean) / jnp.sqrt(var + EPS)
    yn = yn * gamma[None, :, None, None] + beta[None, :, None, None]
    return jnp.where(yn >= 0.0, yn, NEG_SLOPE * yn)


# ------------------------------ main -------------------------------------------

if __name__ == "__main__":
    N, Cin, Cout, H, W = 2, 4, 64, 16, 16

    key = jax.random.PRNGKey(0)
    kw, kg, kb, kx = jax.random.split(key, 4)
    params = {
        "w": jax.random.normal(kw, (Cout, Cin, 4, 4), jnp.float32) / np.sqrt(Cin * 16),
        "gamma": 1.0 + 0.1 * jax.random.normal(kg, (Cout,), jnp.float32),
        "beta": 0.1 * jax.random.normal(kb, (Cout,), jnp.float32),
    }
    x = jax.random.normal(kx, (N, Cin, H, W), jnp.float32)

    ref = np.asarray(downblock_reference(x, params))

    # (a) explicit row_tile=4 -> 2 row tiles per image, exercising the cross-tile
    #     stats reduction; (b) auto (VMEM-budget-driven) tiling path.
    for tag, rt in (("row_tile=4", 4), ("auto-tile", None)):
        fwd = jax.jit(functools.partial(downblock_forward, row_tile=rt))
        out = jax.block_until_ready(fwd(x, params))
        out_np = np.asarray(out)
        # Tolerance reflects bf16 matmul operands and the bf16 conv intermediate
        # (accumulation, stats and normalisation math stay f32).
        if not np.allclose(out_np, ref, atol=3e-2, rtol=3e-2):
            raise AssertionError(
                f"Pallas DownBlock mismatch vs reference ({tag}), "
                f"max abs err {np.max(np.abs(out_np - ref)):.4e}")

    print("KERNEL_OK")
</pallas_src>

<mosaic_0001>
module attributes {stable_mosaic.version = 11 : i64} {
  func.func @_conv_stats_kernel(%arg0: i32, %arg1: i32, %arg2: memref<1x32x64xbf16, #tpu.memory_space<vmem>>, %arg3: memref<64x64xbf16, #tpu.memory_space<vmem>>, %arg4: memref<1x32x64xbf16, #tpu.memory_space<vmem>>, %arg5: memref<1x1x2x64xf32, #tpu.memory_space<vmem>>) attributes {dimension_semantics = [#tpu.dimension_semantics<parallel>, #tpu.dimension_semantics<parallel>], iteration_bounds = array<i64: 2, 2>, scalar_prefetch = 0 : i64, scratch_operands = 0 : i64, tpu.core_type = #tpu.core_type<tc>, window_params = [{transform_indices = @transform_0, window_bounds = array<i64: 1, 32, 64>}, {pipeline_mode = #tpu.pipeline_mode<synchronous>, transform_indices = @transform_1, window_bounds = array<i64: 64, 64>}, {transform_indices = @transform_2, window_bounds = array<i64: 1, 32, 64>}, {transform_indices = @transform_3, window_bounds = array<i64: 1, 1, 2, 64>}]} {
    %c0 = arith.constant 0 : index
    %c0_0 = arith.constant 0 : index
    %c0_1 = arith.constant 0 : index
    %0 = vector.load %arg2[%c0, %c0_0, %c0_1] : memref<1x32x64xbf16, #tpu.memory_space<vmem>>, vector<1x32x64xbf16>
    %1 = vector.shape_cast %0 : vector<1x32x64xbf16> to vector<32x64xbf16>
    %c0_2 = arith.constant 0 : index
    %c0_3 = arith.constant 0 : index
    %2 = vector.load %arg3[%c0_2, %c0_3] : memref<64x64xbf16, #tpu.memory_space<vmem>>, vector<64x64xbf16>
    %cst = arith.constant dense<0.000000e+00> : vector<32x64xf32>
    %3 = tpu.matmul %1, %2, %cst {dimension_numbers = #tpu.dot_dimension_numbers<[1], [0], [0], [1], [0, 0, 1, 1], [], []>} : vector<32x64xbf16>, vector<64x64xbf16>, vector<32x64xf32> -> vector<32x64xf32>
    %4 = arith.truncf %3 : vector<32x64xf32> to vector<32x64xbf16>
    %5 = vector.shape_cast %4 : vector<32x64xbf16> to vector<1x32x64xbf16>
    %c0_4 = arith.constant 0 : index
    %c0_5 = arith.constant 0 : index
    %c0_6 = arith.constant 0 : index
    %6 = vector.load %arg4[%c0_4, %c0_5, %c0_6] : memref<1x32x64xbf16, #tpu.memory_space<vmem>>, vector<1x32x64xbf16>
    tpu.vector_store %arg4[%c0_4, %c0_5, %c0_6], %5 {strides = array<i32>} : memref<1x32x64xbf16, #tpu.memory_space<vmem>>, vector<1x32x64xbf16>,
    %cst_7 = arith.constant dense<0.000000e+00> : vector<64xf32>
    %7 = vector.multi_reduction <add>, %3, %cst_7 [0] : vector<32x64xf32> to vector<64xf32>
    %8 = vector.shape_cast %7 : vector<64xf32> to vector<1x64xf32>
    %9 = arith.mulf %3, %3 : vector<32x64xf32>
    %cst_8 = arith.constant dense<0.000000e+00> : vector<64xf32>
    %10 = vector.multi_reduction <add>, %9, %cst_8 [0] : vector<32x64xf32> to vector<64xf32>
    %11 = vector.shape_cast %10 : vector<64xf32> to vector<1x64xf32>
    %12 = tpu.concatenate %8, %11 in 0 : vector<1x64xf32>, vector<1x64xf32> -> vector<2x64xf32>
    %13 = vector.shape_cast %12 : vector<2x64xf32> to vector<1x1x2x64xf32>
    %c0_9 = arith.constant 0 : index
    %c0_10 = arith.constant 0 : index
    %c0_11 = arith.constant 0 : index
    %c0_12 = arith.constant 0 : index
    %14 = vector.load %arg5[%c0_9, %c0_10, %c0_11, %c0_12] : memref<1x1x2x64xf32, #tpu.memory_space<vmem>>, vector<1x1x2x64xf32>
    tpu.vector_store %arg5[%c0_9, %c0_10, %c0_11, %c0_12], %13 {strides = array<i32>} : memref<1x1x2x64xf32, #tpu.memory_space<vmem>>, vector<1x1x2x64xf32>,
    return
  }
  func.func @transform_0(%arg0: i32, %arg1: i32) -> (i32, i32, i32) {
    %c0_i32 = arith.constant 0 : i32
    %c0_i32_0 = arith.constant 0 : i32
    return %arg0, %arg1, %c0_i32 : i32, i32, i32
  }
  func.func @transform_1(%arg0: i32, %arg1: i32) -> (i32, i32) {
    %c0_i32 = arith.constant 0 : i32
    %c0_i32_0 = arith.constant 0 : i32
    %c0_i32_1 = arith.constant 0 : i32
    return %c0_i32, %c0_i32_0 : i32, i32
  }
  func.func @transform_2(%arg0: i32, %arg1: i32) -> (i32, i32, i32) {
    %c0_i32 = arith.constant 0 : i32
    %c0_i32_0 = arith.constant 0 : i32
    return %arg0, %arg1, %c0_i32 : i32, i32, i32
  }
  func.func @transform_3(%arg0: i32, %arg1: i32) -> (i32, i32, i32, i32) {
    %c0_i32 = arith.constant 0 : i32
    %c0_i32_0 = arith.constant 0 : i32
    %c0_i32_1 = arith.constant 0 : i32
    return %arg0, %arg1, %c0_i32, %c0_i32_0 : i32, i32, i32, i32
  }
}

module attributes {stable_mosaic.version = 11 : i64} {
  func.func @_norm_act_kernel(%arg0: i32, %arg1: i32, %arg2: memref<1x16x128xbf16, #tpu.memory_space<vmem>>, %arg3: memref<1x1x128xf32, #tpu.memory_space<vmem>>, %arg4: memref<1x1x128xf32, #tpu.memory_space<vmem>>, %arg5: memref<1x16x128xf32, #tpu.memory_space<vmem>>) attributes {dimension_semantics = [#tpu.dimension_semantics<parallel>, #tpu.dimension_semantics<parallel>], iteration_bounds = array<i64: 2, 2>, scalar_prefetch = 0 : i64, scratch_operands = 0 : i64, tpu.core_type = #tpu.core_type<tc>, window_params = [{transform_indices = @transform_0, window_bounds = array<i64: 1, 16, 128>}, {transform_indices = @transform_1, window_bounds = array<i64: 1, 1, 128>}, {transform_indices = @transform_2, window_bounds = array<i64: 1, 1, 128>}, {transform_indices = @transform_3, window_bounds = array<i64: 1, 16, 128>}]} {
    %c0 = arith.constant 0 : index
    %c0_0 = arith.constant 0 : index
    %c0_1 = arith.constant 0 : index
    %0 = vector.load %arg2[%c0, %c0_0, %c0_1] : memref<1x16x128xbf16, #tpu.memory_space<vmem>>, vector<1x16x128xbf16>
    %1 = vector.shape_cast %0 : vector<1x16x128xbf16> to vector<16x128xbf16>
    %2 = arith.extf %1 : vector<16x128xbf16> to vector<16x128xf32>
    %c0_2 = arith.constant 0 : index
    %c0_3 = arith.constant 0 : index
    %c0_4 = arith.constant 0 : index
    %3 = vector.load %arg3[%c0_2, %c0_3, %c0_4] : memref<1x1x128xf32, #tpu.memory_space<vmem>>, vector<1x1x128xf32>
    %4 = vector.shape_cast %3 : vector<1x1x128xf32> to vector<1x128xf32>
    %5 = vector.broadcast %4 : vector<1x128xf32> to vector<16x128xf32>
    %6 = arith.mulf %2, %5 : vector<16x128xf32>
    %c0_5 = arith.constant 0 : index
    %c0_6 = arith.constant 0 : index
    %c0_7 = arith.constant 0 : index
    %7 = vector.load %arg4[%c0_5, %c0_6, %c0_7] : memref<1x1x128xf32, #tpu.memory_space<vmem>>, vector<1x1x128xf32>
    %8 = vector.shape_cast %7 : vector<1x1x128xf32> to vector<1x128xf32>
    %9 = vector.broadcast %8 : vector<1x128xf32> to vector<16x128xf32>
    %10 = arith.addf %6, %9 : vector<16x128xf32>
    %cst = arith.constant 0.000000e+00 : f32
    %11 = vector.broadcast %cst : f32 to vector<16x128xf32>
    %12 = arith.cmpf oge, %10, %11 : vector<16x128xf32>
    %cst_8 = arith.constant 2.000000e-01 : f32
    %13 = vector.broadcast %cst_8 : f32 to vector<16x128xf32>
    %14 = arith.mulf %13, %10 : vector<16x128xf32>
    %15 = arith.select %12, %10, %14 : vector<16x128xi1>, vector<16x128xf32>
    %16 = vector.shape_cast %15 : vector<16x128xf32> to vector<1x16x128xf32>
    %c0_9 = arith.constant 0 : index
    %c0_10 = arith.constant 0 : index
    %c0_11 = arith.constant 0 : index
    %17 = vector.load %arg5[%c0_9, %c0_10, %c0_11] : memref<1x16x128xf32, #tpu.memory_space<vmem>>, vector<1x16x128xf32>
    tpu.vector_store %arg5[%c0_9, %c0_10, %c0_11], %16 {strides = array<i32>} : memref<1x16x128xf32, #tpu.memory_space<vmem>>, vector<1x16x128xf32>,
    return
  }
  func.func @transform_0(%arg0: i32, %arg1: i32) -> (i32, i32, i32) {
    %c0_i32 = arith.constant 0 : i32
    %c0_i32_0 = arith.constant 0 : i32
    return %arg0, %arg1, %c0_i32 : i32, i32, i32
  }
  func.func @transform_1(%arg0: i32, %arg1: i32) -> (i32, i32, i32) {
    %c0_i32 = arith.constant 0 : i32
    %c0_i32_0 = arith.constant 0 : i32
    %c0_i32_1 = arith.constant 0 : i32
    return %arg0, %c0_i32, %c0_i32_0 : i32, i32, i32
  }
  func.func @transform_2(%arg0: i32, %arg1: i32) -> (i32, i32, i32) {
    %c0_i32 = arith.constant 0 : i32
    %c0_i32_0 = arith.constant 0 : i32
    %c0_i32_1 = arith.constant 0 : i32
    return %arg0, %c0_i32, %c0_i32_0 : i32, i32, i32
  }
  func.func @transform_3(%arg0: i32, %arg1: i32) -> (i32, i32, i32) {
    %c0_i32 = arith.constant 0 : i32
    %c0_i32_0 = arith.constant 0 : i32
    return %arg0, %arg1, %c0_i32 : i32, i32, i32
  }
}

</mosaic_0001>

<llo_original>
// kernel: downblock_forward.3
$region0: #{downblock_forward.3}
  #allocation0 [shape = 'u32[]', space=smem, size = 0x4, offset = 0x4, fixed_abs, tag = 'smem constant byte address 0x4 - core index']
  #allocation1 [shape = 'u32[144,128]{1,0:T(1,128)}', space=vmem, size = 0x12000, scoped, tag = 'internal scratch']
  %s0 = inlined_call_operand.vmem [shape: bf16[2,32,128], index: 0, kind: input, shape index: {}]
  %s1 = inlined_call_operand.vmem [shape: f32[2,1,128], index: 1, kind: input, shape index: {}]
  %s2 = inlined_call_operand.vmem [shape: f32[2,1,128], index: 2, kind: input, shape index: {}]
  %s3 = inlined_call_operand.vmem [shape: f32[2,32,128], index: 3, kind: output, shape index: {}]
  %s4 = sld [smem:[#allocation0]]
  $region45: #{downblock_forward.3} parent=0
    _
  %s6 = ssub.s32 1, %s4
  %s7 = scalar_select 0, %s6, %s4
  loop: start=0, step=1, limit=6
  $region2: #{downblock_forward.3} parent=0 // loop_pre_header
    _
  $region3: #{downblock_forward.3} parent=0 // loop_header
    %s9 = sphi 0, %s13
    %p10 = scmp.ge.s32.totalorder %s9, 6
    %s16 = sphi 0, %s28
    %s17 = sphi 0, %s24
    %s18 = sphi 0, %s16
    %s19 = sphi 0, %s17
    %s20 = sphi 0, %s18
    %s21 = sphi 0, %s19
    %s33 = sphi 0, %s35
    %s36 = sphi 0, %s33
    %s37 = sphi 0, %s36
    %s53 = sphi 0, %s37
    %s59 = sphi 0, %s61
    %s62 = sphi 0, %s59
    %s63 = sphi 0, %s62
    %s79 = sphi 0, %s63
    %s85 = sphi 0, %s87
    %s88 = sphi 0, %s85
    %s89 = sphi 0, %s88
    %s105 = sphi 0, %s89
    %s113 = sphi 0, %s115
    %s116 = sphi 0, %s113
    %s117 = sphi 0, %s116
    %s133 = sphi 0, %s117
  $region4: #{downblock_forward.3} parent=0 // loop_header_branch
    %12 = sbr.rel (%p10) target = $region8
  $region5: #{downblock_forward.3} parent=0 // loop_body
    %s14 = ssub.s32 %s9, 1
    %s15 = ssub.s32 %s9, 2
    %s22 = sadd.s32 1, %s17
    %p23 = scmp.ge.s32.totalorder %s22, 2
    %s24 = scalar_select %p23, 0, %s22
    %s25 = sadd.s32 1, %s16
    %s26 = scalar_select %p23, %s25, %s16
    %p27 = scmp.ge.s32.totalorder %s26, 2
    %s28 = scalar_select %p27, 0, %s26
    %s29 = ssub.s32 %s16, %s28
    %s30 = ssub.s32 %s17, %s24
    %s31 = sor.u32 %s29, %s30
    %p32 = scmp.eq.s32.totalorder %s31, 0
    %s34 = sadd.s32 %s33, 1
    %s35 = scalar_select %p32, %s33, %s34
    %p38 = pneg %p32
    %p39 = scmp.eq.s32.totalorder %s9, 3
    %p40 = por %p38, %p39
    %p41 = scmp.ne.s32.totalorder %s33, %s36
    %p42 = scmp.eq.s32.totalorder %s9, 0
    %p43 = por %p41, %p42
    %p44 = scmp.ne.s32.totalorder %s33, %s36
    %p45 = scmp.eq.s32.totalorder %s14, 3
    %p46 = por %p44, %p45
    %p47 = scmp.ne.s32.totalorder %s36, %s37
    %p48 = scmp.eq.s32.totalorder %s14, 0
    %p49 = por %p47, %p48
    %p50 = scmp.ne.s32.totalorder %s36, %s37
    %p51 = scmp.eq.s32.totalorder %s15, 3
    %p52 = por %p50, %p51
    %p54 = scmp.ne.s32.totalorder %s37, %s53
    %p55 = scmp.eq.s32.totalorder %s15, 0
    %p56 = por %p54, %p55
    %s57 = ssub.s32 %s16, %s28
    %p58 = scmp.eq.s32.totalorder %s57, 0
    %s60 = sadd.s32 %s59, 1
    %s61 = scalar_select %p58, %s59, %s60
    %p64 = pneg %p58
    %p65 = scmp.eq.s32.totalorder %s9, 3
    %p66 = por %p64, %p65
    %p67 = scmp.ne.s32.totalorder %s59, %s62
    %p68 = scmp.eq.s32.totalorder %s9, 0
    %p69 = por %p67, %p68
    %p70 = scmp.ne.s32.totalorder %s59, %s62
    %p71 = scmp.eq.s32.totalorder %s14, 3
    %p72 = por %p70, %p71
    %p73 = scmp.ne.s32.totalorder %s62, %s63
    %p74 = scmp.eq.s32.totalorder %s14, 0
    %p75 = por %p73, %p74
    %p76 = scmp.ne.s32.totalorder %s62, %s63
    %p77 = scmp.eq.s32.totalorder %s15, 3
    %p78 = por %p76, %p77
    %p80 = scmp.ne.s32.totalorder %s63, %s79
    %p81 = scmp.eq.s32.totalorder %s15, 0
    %p82 = por %p80, %p81
    %s83 = ssub.s32 %s16, %s28
    %p84 = scmp.eq.s32.totalorder %s83, 0
    %s86 = sadd.s32 %s85, 1
    %s87 = scalar_select %p84, %s85, %s86
    %p90 = pneg %p84
    %p91 = scmp.eq.s32.totalorder %s9, 3
    %p92 = por %p90, %p91
    %p93 = scmp.ne.s32.totalorder %s85, %s88
    %p94 = scmp.eq.s32.totalorder %s9, 0
    %p95 = por %p93, %p94
    %p96 = scmp.ne.s32.totalorder %s85, %s88
    %p97 = scmp.eq.s32.totalorder %s14, 3
    %p98 = por %p96, %p97
    %p99 = scmp.ne.s32.totalorder %s88, %s89
    %p100 = scmp.eq.s32.totalorder %s14, 0
    %p101 = por %p99, %p100
    %p102 = scmp.ne.s32.totalorder %s88, %s89
    %p103 = scmp.eq.s32.totalorder %s15, 3
    %p104 = por %p102, %p103
    %p106 = scmp.ne.s32.totalorder %s89, %s105
    %p107 = scmp.eq.s32.totalorder %s15, 0
    %p108 = por %p106, %p107
    %s109 = ssub.s32 %s16, %s28
    %s110 = ssub.s32 %s17, %s24
    %s111 = sor.u32 %s109, %s110
    %p112 = scmp.eq.s32.totalorder %s111, 0
    %s114 = sadd.s32 %s113, 1
    %s115 = scalar_select %p112, %s113, %s114
    %p118 = pneg %p112
    %p119 = scmp.eq.s32.totalorder %s9, 3
    %p120 = por %p118, %p119
    %p121 = scmp.ne.s32.totalorder %s113, %s116
    %p122 = scmp.eq.s32.totalorder %s9, 0
    %p123 = por %p121, %p122
    %p124 = scmp.ne.s32.totalorder %s113, %s116
    %p125 = scmp.eq.s32.totalorder %s14, 3
    %p126 = por %p124, %p125
    %p127 = scmp.ne.s32.totalorder %s116, %s117
    %p128 = scmp.eq.s32.totalorder %s14, 0
    %p129 = por %p127, %p128
    %p130 = scmp.ne.s32.totalorder %s116, %s117
    %p131 = scmp.eq.s32.totalorder %s15, 3
    %p132 = por %p130, %p131
    %p134 = scmp.ne.s32.totalorder %s117, %s133
    %p135 = scmp.eq.s32.totalorder %s15, 0
    %p136 = por %p134, %p135
    %p137 = scmp.le.s32.totalorder 1, %s9
    %p138 = scmp.lt.s32.totalorder %s9, 5
    %p139 = pnand %p137, %p138
    %p140 = pneg %p139
    // Predicated region
    $region9: #{downblock_forward.3} parent=5 // pred_check
      _
    $region10: #{downblock_forward.3} parent=5 // pred_check_branch
      %142 = sbr.rel (%p139) target = $region12
    $region11: #{downblock_forward.3} parent=5 // pred_region
      %s143 = ssub.s32 %s9, 1
    $region12: #{downblock_forward.3} parent=5 // pred_fallthru
      _
    %p144 = scmp.lt.s32.totalorder %s9, 4
    // Predicated region
    $region13: #{downblock_forward.3} parent=5 // pred_check
      %p145 = pneg %p144
    $region14: #{downblock_forward.3} parent=5 // pred_check_branch
      %147 = sbr.rel (%p145) target = $region16
    $region15: #{downblock_forward.3} parent=5 // pred_region
      // Predicated region
      $region17: #{downblock_forward.3} parent=15 // pred_check
        %p148 = pneg %p43
      $region18: #{downblock_forward.3} parent=15 // pred_check_branch
        %150 = sbr.rel (%p148) target = $region20
      $region19: #{downblock_forward.3} parent=15 // pred_region
        %s151 = smul.u32 2, %s17
        %p152 = scmp.lt.s32.totalorder %s16, 1
        %s153 = scalar_select %p152, %s16, 1
        %p154 = scmp.lt.s32.totalorder %s151, 3
        %s155 = scalar_select %p154, %s151, 3
        %s156 = smul.addr %s153, 4
        %s157 = sadd.s32 %s155, %s156
        %s158 = smul.addr %s157, 4
        %s159 = scalar_lea.vmem %s0, %s158
        %s160 = smul.u32 2, %s17
      $region20: #{downblock_forward.3} parent=15 // pred_fallthru
        _
      // Predicated region
      $region21: #{downblock_forward.3} parent=15 // pred_check
        %p161 = pneg %p69
      $region22: #{downblock_forward.3} parent=15 // pred_check_branch
        %163 = sbr.rel (%p161) target = $region24
      $region23: #{downblock_forward.3} parent=15 // pred_region
        %p164 = scmp.lt.s32.totalorder %s16, 1
        %s165 = scalar_select %p164, %s16, 1
        %s166 = scalar_lea.vmem %s1, %s165
      $region24: #{downblock_forward.3} parent=15 // pred_fallthru
        _
      // Predicated region
      $region25: #{downblock_forward.3} parent=15 // pred_check
        %p167 = pneg %p95
      $region26: #{downblock_forward.3} parent=15 // pred_check_branch
        %169 = sbr.rel (%p167) target = $region28
      $region27: #{downblock_forward.3} parent=15 // pred_region
        %p170 = scmp.lt.s32.totalorder %s16, 1
        %s171 = scalar_select %p170, %s16, 1
        %s172 = scalar_lea.vmem %s2, %s171
      $region28: #{downblock_forward.3} parent=15 // pred_fallthru
        _
    $region16: #{downblock_forward.3} parent=5 // pred_fallthru
      _
    %p173 = scmp.le.s32.totalorder 1, %s9
    %p174 = scmp.lt.s32.totalorder %s9, 5
    %p175 = pnand %p173, %p174
    %p176 = pneg %p175
    // Predicated region
    $region29: #{downblock_forward.3} parent=5 // pred_check
      _
    $region30: #{downblock_forward.3} parent=5 // pred_check_branch
      %178 = sbr.rel (%p175) target = $region32
    $region31: #{downblock_forward.3} parent=5 // pred_region
      %s179 = ssub.s32 %s9, 1
      %s180 = smul.u32 2, %s19
      %p181 = scmp.lt.s32.totalorder %s18, 1
      %s182 = scalar_select %p181, %s18, 1
      %p183 = scmp.lt.s32.totalorder %s180, 3
      %s184 = scalar_select %p183, %s180, 3
      %s185 = smul.addr %s182, 4
      %s186 = sadd.s32 %s184, %s185
      %s187 = smul.addr %s186, 4
      %s188 = scalar_lea.vmem %s0, %s187
      %p189 = pneg %p49
      %p190 = pneg %p46
      %p191 = scmp.lt.s32.totalorder %s18, 1
      %s192 = scalar_select %p191, %s18, 1
      %s193 = scalar_lea.vmem %s1, %s192
      %p194 = pneg %p75
      %p195 = pneg %p72
      %p196 = scmp.lt.s32.totalorder %s18, 1
      %s197 = scalar_select %p196, %s18, 1
      %s198 = scalar_lea.vmem %s2, %s197
      %p199 = pneg %p101
      %p200 = pneg %p98
      %p201 = pneg %p129
      %p202 = pneg %p126
      %s203 = smul.u32 2, %s19
      %p204 = scmp.lt.s32.totalorder %s18, 1
      %s205 = scalar_select %p204, %s18, 1
      %p206 = scmp.lt.s32.totalorder %s203, 3
      %s207 = scalar_select %p206, %s203, 3
      %s208 = smul.addr %s205, 4
      %s209 = sadd.s32 %s207, %s208
      %s210 = smul.addr %s209, 8
      %s211 = scalar_lea.vmem %s3, %s210
      %s212 = smul.u32 2, %s19
      %p213 = scmp.lt.s32.totalorder %s18, 1
      %s214 = scalar_select %p213, %s18, 1
      %p215 = scmp.lt.s32.totalorder %s212, 3
      %s216 = scalar_select %p215, %s212, 3
      %s217 = smul.addr %s214, 4
      %s218 = sadd.s32 %s216, %s217
      %s219 = smul.addr %s218, 4
      %s220 = scalar_lea.vmem %s0, %s219
      %s221 = smul.u32 2, %s19
      %p222 = scmp.lt.s32.totalorder %s18, 1
      %s223 = scalar_select %p222, %s18, 1
      %s224 = scalar_lea.vmem %s1, %s223
      %p225 = scmp.lt.s32.totalorder %s18, 1
      %s226 = scalar_select %p225, %s18, 1
      %s227 = scalar_lea.vmem %s2, %s226
      %s228 = smul.u32 2, %s19
      %p229 = scmp.lt.s32.totalorder %s18, 1
      %s230 = scalar_select %p229, %s18, 1
      %p231 = scmp.lt.s32.totalorder %s228, 3
      %s232 = scalar_select %p231, %s228, 3
      %s233 = smul.addr %s230, 4
      %s234 = sadd.s32 %s232, %s233
      %s235 = smul.addr %s234, 8
      %s236 = scalar_lea.vmem %s3, %s235
      %s237 = smul.u32 2, %s19
      %v238 = vld [vmem:[%s220] sm:$0xf]
      %v239 = vld [vmem:[%s220 + $0x4] sm:$0xf]
      %v240 = vunpack.c.l.bf16 %v238
      %v241 = vunpack.c.l.bf16 %v239
      %v242 = vld [vmem:[%s224] sm:$0x1]
      %v244 = vlaneseq
      %v245 = vshrl.u32 %v244, 7
      %v246 = vsub.s32 0, %v245
      %v247 = vrot.slane %v242, %v246
      %v249 = vmul.f32 %v240, %v247
      %v250 = vmul.f32 %v241, %v247
      %v251 = vld [vmem:[%s227] sm:$0x1]
      %v253 = vlaneseq
      %v254 = vshrl.u32 %v253, 7
      %v255 = vsub.s32 0, %v254
      %v256 = vrot.slane %v251, %v255
      %v258 = vadd.f32 %v249, %v256
      %v259 = vadd.f32 %v250, %v256
      %vm260 = vcmp.ge.f32.partialorder %v258, 0.0
      %vm261 = vcmp.ge.f32.partialorder %v259, 0.0
      %v262 = vmul.f32 %v258, 0.2
      %v263 = vmul.f32 %v259, 0.2
      %v264 = vsel %vm260, %v258, %v262
      %v265 = vsel %vm261, %v259, %v263
      %266 = vst [vmem:[%s236] sm:$0xff] %v264
      %267 = vst [vmem:[%s236 + $0x8] sm:$0xff] %v265
      %s268 = smul.u32 2, %s19
      %p269 = scmp.lt.s32.totalorder %s18, 1
      %s270 = scalar_select %p269, %s18, 1
      %p271 = scmp.lt.s32.totalorder %s268, 3
      %s272 = scalar_select %p271, %s268, 3
      %s273 = smul.addr %s270, 4
      %s274 = sadd.s32 %s272, %s273
      %s275 = smul.addr %s274, 8
      %s276 = scalar_lea.vmem %s3, %s275
      // Predicated region
      $region33: #{downblock_forward.3} parent=31 // pred_check
        %p277 = pneg %p126
      $region34: #{downblock_forward.3} parent=31 // pred_check_branch
        %279 = sbr.rel (%p277) target = $region36
      $region35: #{downblock_forward.3} parent=31 // pred_region
        %s280 = smul.u32 2, %s19
      $region36: #{downblock_forward.3} parent=31 // pred_fallthru
        _
    $region32: #{downblock_forward.3} parent=5 // pred_fallthru
      _
    %p281 = scmp.le.s32.totalorder 2, %s9
    // Predicated region
    $region37: #{downblock_forward.3} parent=5 // pred_check
      %p282 = pneg %p281
    $region38: #{downblock_forward.3} parent=5 // pred_check_branch
      %284 = sbr.rel (%p282) target = $region40
    $region39: #{downblock_forward.3} parent=5 // pred_region
      %s285 = ssub.s32 %s9, 2
      // Predicated region
      $region41: #{downblock_forward.3} parent=39 // pred_check
        %p286 = pneg %p132
      $region42: #{downblock_forward.3} parent=39 // pred_check_branch
        %288 = sbr.rel (%p286) target = $region44
      $region43: #{downblock_forward.3} parent=39 // pred_region
        %s289 = smul.u32 2, %s21
        %p290 = scmp.lt.s32.totalorder %s20, 1
        %s291 = scalar_select %p290, %s20, 1
        %p292 = scmp.lt.s32.totalorder %s289, 3
        %s293 = scalar_select %p292, %s289, 3
        %s294 = smul.addr %s291, 4
        %s295 = sadd.s32 %s293, %s294
        %s296 = smul.addr %s295, 8
        %s297 = scalar_lea.vmem %s3, %s296
      $region44: #{downblock_forward.3} parent=39 // pred_fallthru
        _
    $region40: #{downblock_forward.3} parent=5 // pred_fallthru
      _
  $region6: #{downblock_forward.3} parent=0 // loop_footer
    %s13 = sadd.s32 1, %s9
  $region7: #{downblock_forward.3} parent=0 // loop_footer_branch
    %8 = sbr.rel target = $region3
  $region8: #{downblock_forward.3} parent=0 // loop_exit
    _

// kernel: downblock_forward.2
$region0: #{downblock_forward.2}
  #allocation0 [shape = 'u32[]', space=smem, size = 0x4, offset = 0x4, fixed_abs, tag = 'smem constant byte address 0x4 - core index']
  #allocation1 [shape = 'u32[144,128]{1,0:T(1,128)}', space=vmem, size = 0x12000, scoped, tag = 'internal scratch']
  %s0 = inlined_call_operand.vmem [shape: bf16[2,64,64], index: 0, kind: input, shape index: {}]
  %s1 = inlined_call_operand.vmem [shape: bf16[64,64], index: 1, kind: input, shape index: {}]
  %s2 = inlined_call_operand.vmem [shape: bf16[2,64,64], index: 2, kind: output, shape index: {0}]
  %s3 = inlined_call_operand.vmem [shape: f32[2,2,2,64], index: 3, kind: output, shape index: {1}]
  %4 = xla_tuple %s2, %s3
  %s5 = sld [smem:[#allocation0]]
  $region49: #{downblock_forward.2} parent=0
    _
  %s7 = ssub.s32 1, %s5
  %s8 = scalar_select 0, %s7, %s5
  loop: start=0, step=1, limit=6
  $region2: #{downblock_forward.2} parent=0 // loop_pre_header
    _
  $region3: #{downblock_forward.2} parent=0 // loop_header
    %s10 = sphi 0, %s14
    %p11 = scmp.ge.s32.totalorder %s10, 6
    %s17 = sphi 0, %s29
    %s18 = sphi 0, %s25
    %s19 = sphi 0, %s17
    %s20 = sphi 0, %s18
    %s21 = sphi 0, %s19
    %s22 = sphi 0, %s20
    %s34 = sphi 0, %s36
    %s37 = sphi 0, %s34
    %s38 = sphi 0, %s37
    %s54 = sphi 0, %s38
    %s58 = sphi 0, %s58
    %s60 = sphi 0, %s58
    %s61 = sphi 0, %s60
    %s75 = sphi 0, %s61
    %s83 = sphi 0, %s85
    %s86 = sphi 0, %s83
    %s87 = sphi 0, %s86
    %s103 = sphi 0, %s87
    %s111 = sphi 0, %s113
    %s114 = sphi 0, %s111
    %s115 = sphi 0, %s114
    %s131 = sphi 0, %s115
  $region4: #{downblock_forward.2} parent=0 // loop_header_branch
    %13 = sbr.rel (%p11) target = $region8
  $region5: #{downblock_forward.2} parent=0 // loop_body
    %s15 = ssub.s32 %s10, 1
    %s16 = ssub.s32 %s10, 2
    %s23 = sadd.s32 1, %s18
    %p24 = scmp.ge.s32.totalorder %s23, 2
    %s25 = scalar_select %p24, 0, %s23
    %s26 = sadd.s32 1, %s17
    %s27 = scalar_select %p24, %s26, %s17
    %p28 = scmp.ge.s32.totalorder %s27, 2
    %s29 = scalar_select %p28, 0, %s27
    %s30 = ssub.s32 %s17, %s29
    %s31 = ssub.s32 %s18, %s25
    %s32 = sor.u32 %s30, %s31
    %p33 = scmp.eq.s32.totalorder %s32, 0
    %s35 = sadd.s32 %s34, 1
    %s36 = scalar_select %p33, %s34, %s35
    %p39 = pneg %p33
    %p40 = scmp.eq.s32.totalorder %s10, 3
    %p41 = por %p39, %p40
    %p42 = scmp.ne.s32.totalorder %s34, %s37
    %p43 = scmp.eq.s32.totalorder %s10, 0
    %p44 = por %p42, %p43
    %p45 = scmp.ne.s32.totalorder %s34, %s37
    %p46 = scmp.eq.s32.totalorder %s15, 3
    %p47 = por %p45, %p46
    %p48 = scmp.ne.s32.totalorder %s37, %s38
    %p49 = scmp.eq.s32.totalorder %s15, 0
    %p50 = por %p48, %p49
    %p51 = scmp.ne.s32.totalorder %s37, %s38
    %p52 = scmp.eq.s32.totalorder %s16, 3
    %p53 = por %p51, %p52
    %p55 = scmp.ne.s32.totalorder %s38, %s54
    %p56 = scmp.eq.s32.totalorder %s16, 0
    %p57 = por %p55, %p56
    %s59 = sadd.s32 %s58, 1
    %p62 = scmp.eq.s32.totalorder %s10, 3
    %p63 = scmp.ne.s32.totalorder %s58, %s60
    %p64 = scmp.eq.s32.totalorder %s10, 0
    %p65 = por %p63, %p64
    %p66 = scmp.ne.s32.totalorder %s58, %s60
    %p67 = scmp.eq.s32.totalorder %s15, 3
    %p68 = por %p66, %p67
    %p69 = scmp.ne.s32.totalorder %s60, %s61
    %p70 = scmp.eq.s32.totalorder %s15, 0
    %p71 = por %p69, %p70
    %p72 = scmp.ne.s32.totalorder %s60, %s61
    %p73 = scmp.eq.s32.totalorder %s16, 3
    %p74 = por %p72, %p73
    %p76 = scmp.ne.s32.totalorder %s61, %s75
    %p77 = scmp.eq.s32.totalorder %s16, 0
    %p78 = por %p76, %p77
    %s79 = ssub.s32 %s17, %s29
    %s80 = ssub.s32 %s18, %s25
    %s81 = sor.u32 %s79, %s80
    %p82 = scmp.eq.s32.totalorder %s81, 0
    %s84 = sadd.s32 %s83, 1
    %s85 = scalar_select %p82, %s83, %s84
    %p88 = pneg %p82
    %p89 = scmp.eq.s32.totalorder %s10, 3
    %p90 = por %p88, %p89
    %p91 = scmp.ne.s32.totalorder %s83, %s86
    %p92 = scmp.eq.s32.totalorder %s10, 0
    %p93 = por %p91, %p92
    %p94 = scmp.ne.s32.totalorder %s83, %s86
    %p95 = scmp.eq.s32.totalorder %s15, 3
    %p96 = por %p94, %p95
    %p97 = scmp.ne.s32.totalorder %s86, %s87
    %p98 = scmp.eq.s32.totalorder %s15, 0
    %p99 = por %p97, %p98
    %p100 = scmp.ne.s32.totalorder %s86, %s87
    %p101 = scmp.eq.s32.totalorder %s16, 3
    %p102 = por %p100, %p101
    %p104 = scmp.ne.s32.totalorder %s87, %s103
    %p105 = scmp.eq.s32.totalorder %s16, 0
    %p106 = por %p104, %p105
    %s107 = ssub.s32 %s17, %s29
    %s108 = ssub.s32 %s18, %s25
    %s109 = sor.u32 %s107, %s108
    %p110 = scmp.eq.s32.totalorder %s109, 0
    %s112 = sadd.s32 %s111, 1
    %s113 = scalar_select %p110, %s111, %s112
    %p116 = pneg %p110
    %p117 = scmp.eq.s32.totalorder %s10, 3
    %p118 = por %p116, %p117
    %p119 = scmp.ne.s32.totalorder %s111, %s114
    %p120 = scmp.eq.s32.totalorder %s10, 0
    %p121 = por %p119, %p120
    %p122 = scmp.ne.s32.totalorder %s111, %s114
    %p123 = scmp.eq.s32.totalorder %s15, 3
    %p124 = por %p122, %p123
    %p125 = scmp.ne.s32.totalorder %s114, %s115
    %p126 = scmp.eq.s32.totalorder %s15, 0
    %p127 = por %p125, %p126
    %p128 = scmp.ne.s32.totalorder %s114, %s115
    %p129 = scmp.eq.s32.totalorder %s16, 3
    %p130 = por %p128, %p129
    %p132 = scmp.ne.s32.totalorder %s115, %s131
    %p133 = scmp.eq.s32.totalorder %s16, 0
    %p134 = por %p132, %p133
    %p135 = scmp.le.s32.totalorder 1, %s10
    %p136 = scmp.lt.s32.totalorder %s10, 5
    %p137 = pnand %p135, %p136
    %p138 = pneg %p137
    // Predicated region
    $region9: #{downblock_forward.2} parent=5 // pred_check
      _
    $region10: #{downblock_forward.2} parent=5 // pred_check_branch
      %140 = sbr.rel (%p137) target = $region12
    $region11: #{downblock_forward.2} parent=5 // pred_region
      %s141 = ssub.s32 %s10, 1
      // Predicated region
      $region13: #{downblock_forward.2} parent=11 // pred_check
        %p142 = pneg %p71
      $region14: #{downblock_forward.2} parent=11 // pred_check_branch
        %144 = sbr.rel (%p142) target = $region16
      $region15: #{downblock_forward.2} parent=11 // pred_region
        _
      $region16: #{downblock_forward.2} parent=11 // pred_fallthru
        _
    $region12: #{downblock_forward.2} parent=5 // pred_fallthru
      _
    %p145 = scmp.lt.s32.totalorder %s10, 4
    // Predicated region
    $region17: #{downblock_forward.2} parent=5 // pred_check
      %p146 = pneg %p145
    $region18: #{downblock_forward.2} parent=5 // pred_check_branch
      %148 = sbr.rel (%p146) target = $region20
    $region19: #{downblock_forward.2} parent=5 // pred_region
      // Predicated region
      $region21: #{downblock_forward.2} parent=19 // pred_check
        %p149 = pneg %p44
      $region22: #{downblock_forward.2} parent=19 // pred_check_branch
        %151 = sbr.rel (%p149) target = $region24
      $region23: #{downblock_forward.2} parent=19 // pred_region
        %s152 = smul.u32 4, %s18
        %p153 = scmp.lt.s32.totalorder %s17, 1
        %s154 = scalar_select %p153, %s17, 1
        %p155 = scmp.lt.s32.totalorder %s152, 7
        %s156 = scalar_select %p155, %s152, 7
        %s157 = smul.addr %s154, 8
        %s158 = sadd.s32 %s156, %s157
        %s159 = smul.addr %s158, 4
        %s160 = scalar_lea.vmem %s0, %s159
        %s161 = smul.u32 4, %s18
      $region24: #{downblock_forward.2} parent=19 // pred_fallthru
        _
    $region20: #{downblock_forward.2} parent=5 // pred_fallthru
      _
    %p162 = scmp.le.s32.totalorder 1, %s10
    %p163 = scmp.lt.s32.totalorder %s10, 5
    %p164 = pnand %p162, %p163
    %p165 = pneg %p164
    // Predicated region
    $region25: #{downblock_forward.2} parent=5 // pred_check
      _
    $region26: #{downblock_forward.2} parent=5 // pred_check_branch
      %167 = sbr.rel (%p164) target = $region28
    $region27: #{downblock_forward.2} parent=5 // pred_region
      %s168 = ssub.s32 %s10, 1
      %s169 = smul.u32 4, %s20
      %p170 = scmp.lt.s32.totalorder %s19, 1
      %s171 = scalar_select %p170, %s19, 1
      %p172 = scmp.lt.s32.totalorder %s169, 7
      %s173 = scalar_select %p172, %s169, 7
      %s174 = smul.addr %s171, 8
      %s175 = sadd.s32 %s173, %s174
      %s176 = smul.addr %s175, 4
      %s177 = scalar_lea.vmem %s0, %s176
      %p178 = pneg %p50
      %p179 = pneg %p47
      %p180 = pneg %p71
      %p181 = pneg %p68
      %p182 = pneg %p99
      %p183 = pneg %p96
      %s184 = smul.u32 4, %s20
      %p185 = scmp.lt.s32.totalorder %s19, 1
      %s186 = scalar_select %p185, %s19, 1
      %p187 = scmp.lt.s32.totalorder %s184, 7
      %s188 = scalar_select %p187, %s184, 7
      %s189 = smul.addr %s186, 8
      %s190 = sadd.s32 %s188, %s189
      %s191 = smul.addr %s190, 4
      %s192 = scalar_lea.vmem %s2, %s191
      %p193 = pneg %p127
      %p194 = pneg %p124
      %p195 = scmp.lt.s32.totalorder %s19, 1
      %s196 = scalar_select %p195, %s19, 1
      %p197 = scmp.lt.s32.totalorder %s20, 1
      %s198 = scalar_select %p197, %s20, 1
      %s199 = smul.addr %s196, 2
      %s200 = sadd.s32 %s198, %s199
      %s201 = smul.addr %s200, 2
      %s202 = scalar_lea.vmem %s3, %s201
      %s203 = smul.u32 4, %s20
      %p204 = scmp.lt.s32.totalorder %s19, 1
      %s205 = scalar_select %p204, %s19, 1
      %p206 = scmp.lt.s32.totalorder %s203, 7
      %s207 = scalar_select %p206, %s203, 7
      %s208 = smul.addr %s205, 8
      %s209 = sadd.s32 %s207, %s208
      %s210 = smul.addr %s209, 4
      %s211 = scalar_lea.vmem %s0, %s210
      %s212 = smul.u32 4, %s20
      %s213 = smul.u32 4, %s20
      %p214 = scmp.lt.s32.totalorder %s19, 1
      %s215 = scalar_select %p214, %s19, 1
      %p216 = scmp.lt.s32.totalorder %s213, 7
      %s217 = scalar_select %p216, %s213, 7
      %s218 = smul.addr %s215, 8
      %s219 = sadd.s32 %s217, %s218
      %s220 = smul.addr %s219, 4
      %s221 = scalar_lea.vmem %s2, %s220
      %s222 = smul.u32 4, %s20
      %p223 = scmp.lt.s32.totalorder %s19, 1
      %s224 = scalar_select %p223, %s19, 1
      %p225 = scmp.lt.s32.totalorder %s20, 1
      %s226 = scalar_select %p225, %s20, 1
      %s227 = smul.addr %s224, 2
      %s228 = sadd.s32 %s226, %s227
      %s229 = smul.addr %s228, 2
      %s230 = scalar_lea.vmem %s3, %s229
      %v232 = vld [vmem:[%s211] sm:$0xf]
      %v233 = vld [vmem:[%s211 + $0x4] sm:$0xf]
      %v234 = vld [vmem:[%s211 + $0x8] sm:$0xf]
      %v235 = vld [vmem:[%s211 + $0xc] sm:$0xf]
      %v236 = vld [vmem:[%s1] sm:$0xf]
      %v237 = vld [vmem:[%s1 + $0x4] sm:$0xf]
      %v238 = vld [vmem:[%s1 + $0x8] sm:$0xf]
      %v239 = vld [vmem:[%s1 + $0xc] sm:$0xf]
      %v240 = vld [vmem:[%s1 + $0x10] sm:$0xf]
      %v241 = vld [vmem:[%s1 + $0x14] sm:$0xf]
      %v242 = vld [vmem:[%s1 + $0x18] sm:$0xf]
      %v243 = vld [vmem:[%s1 + $0x1c] sm:$0xf]
      %v248 = vunpack.c.l.b16 %v232
      %v249 = vunpack.c.l.b16 %v233
      %v250 = vunpack.c.l.b16 %v234
      %v251 = vunpack.c.l.b16 %v235
      %v252 = vpack.c.b16 %v249, %v248
      %v253 = vpack.c.b16 %v251, %v250
      %v262 = vunpack.c.l.b16 %v236
      %v263 = vunpack.c.l.b16 %v237
      %v264 = vunpack.c.l.b16 %v238
      %v265 = vunpack.c.l.b16 %v239
      %v266 = vunpack.c.l.b16 %v240
      %v267 = vunpack.c.l.b16 %v241
      %v268 = vunpack.c.l.b16 %v242
      %v269 = vunpack.c.l.b16 %v243
      %v270 = vpack.c.b16 %v263, %v262
      %v271 = vpack.c.b16 %v265, %v264
      %v272 = vpack.c.b16 %v267, %v266
      %v273 = vpack.c.b16 %v269, %v268
      %vm278 = vcmask 523264
      %v280 = vsel %vm278, %v252, 0
      %v283 = vsel %vm278, %v253, 0
      %285 = vmatprep.subr.bf16.mxu0 0
      %286 = vmatpush1.bf16.msra.mxu0 0
      %287 = vmatprep.subr.bf16.mxu0 0
      %288 = vmatpush1.bf16.msra.mxu0 0
      %289 = vmatprep.subr.bf16.mxu0 0
      %290 = vmatpush1.bf16.msra.mxu0 0
      %291 = vmatprep.subr.bf16.mxu0 0
      %292 = vmatpush1.bf16.msra.mxu0 0
      %293 = vmatprep.subr.bf16.mxu0 0
      %294 = vmatpush1.bf16.msra.mxu0 %v273
      %295 = vmatprep.subr.bf16.mxu0 0
      %296 = vmatpush1.bf16.msra.mxu0 %v272
      %297 = vmatprep.subr.bf16.mxu0 0
      %298 = vmatpush1.bf16.msra.mxu0 %v271
      %299 = vmatprep.subr.bf16.mxu0 0
      %300 = vmatpush1.bf16.msra.mxu0 %v270
      %301 = vmatprep.subr.bf16.mxu0 0
      %302 = vmatpush2.bf16.msra.mxu0 0
      %303 = vmatprep.subr.bf16.mxu0 0
      %304 = vmatpush2.bf16.msra.mxu0 0
      %305 = vmatprep.subr.bf16.mxu0 0
      %306 = vmatpush2.bf16.msra.mxu0 0
      %307 = vmatprep.subr.bf16.mxu0 0
      %308 = vmatpush2.bf16.msra.mxu0 0
      %309 = vmatprep.subr.bf16.mxu0 0
      %310 = vmatpush2.bf16.msra.mxu0 0
      %311 = vmatprep.subr.bf16.mxu0 0
      %312 = vmatpush2.bf16.msra.mxu0 0
      %313 = vmatprep.subr.bf16.mxu0 0
      %314 = vmatpush2.bf16.msra.mxu0 0
      %315 = vmatprep.subr.bf16.mxu0 0
      %316 = vmatpush2.bf16.msra.mxu0 0
      %317 = vmatprep.mubr.bf16.mxu0 0
      %318 = vmatmul.mubr.bf16.gmra.mxu0 %v280
      %v319 = vpop.f32.mrf.mxu0
      %v320 = vadd.f32 0.0, %v319
      %v321 = vpop.f32.mrf.mxu0
      %v322 = vpop.f32.mrf.mxu0
      %v323 = vadd.f32 0.0, %v322
      %v324 = vpop.f32.mrf.mxu0
      %325 = vmatprep.mubr.bf16.mxu0 0
      %326 = vmatmul.mubr.bf16.gmra.mxu0 %v283
      %v327 = vpop.f32.mrf.mxu0
      %v328 = vadd.f32 0.0, %v327
      %v329 = vpop.f32.mrf.mxu0
      %v330 = vpop.f32.mrf.mxu0
      %v331 = vadd.f32 0.0, %v330
      %v332 = vpop.f32.mrf.mxu0
      %333 = vdwg.mxu0
      %v334 = vpack.c.bf16 %v323, %v320
      %v335 = vpack.c.bf16 %v331, %v328
      %v338 = vunpack.c.l.b16 %v334
      %v339 = vunpack.c.h.b16 %v334
      %v340 = vunpack.c.l.b16 %v335
      %v341 = vunpack.c.h.b16 %v335
      %v342 = vpack.c.b16 %v338, %v338
      %v343 = vpack.c.b16 %v339, %v339
      %v344 = vpack.c.b16 %v340, %v340
      %v345 = vpack.c.b16 %v341, %v341
      %vm350 = vcmask 519168
      %351 = vst.msk [vmem:[%s221] sm:$0xf] %vm350, %v342
      %352 = vst.msk [vmem:[%s221 + $0x4] sm:$0xf] %vm350, %v343
      %353 = vst.msk [vmem:[%s221 + $0x8] sm:$0xf] %vm350, %v344
      %354 = vst.msk [vmem:[%s221 + $0xc] sm:$0xf] %vm350, %v345
      %v355 = vsel %vm278, %v320, 0.0
      %v356 = vsel %vm278, %v323, 0.0
      %v357 = vadd.f32 %v355, %v356
      %v358 = vsel %vm278, %v328, 0.0
      %v359 = vadd.f32 %v357, %v358
      %v360 = vsel %vm278, %v331, 0.0
      %v361 = vadd.f32 %v359, %v360
      %v362 = vrot.slane %v361, 4
      %v363 = vadd.f32 %v361, %v362
      %v364 = vrot.slane %v363, 2
      %v365 = vadd.f32 %v363, %v364
      %v366 = vrot.slane %v365, 1
      %v367 = vadd.f32 %v365, %v366
      %v368 = vmul.f32 %v320, %v320
      %v369 = vmul.f32 %v323, %v323
      %v370 = vmul.f32 %v328, %v328
      %v371 = vmul.f32 %v331, %v331
      %v372 = vsel %vm278, %v368, 0.0
      %v373 = vsel %vm278, %v369, 0.0
      %v374 = vadd.f32 %v372, %v373
      %v375 = vsel %vm278, %v370, 0.0
      %v376 = vadd.f32 %v374, %v375
      %v377 = vsel %vm278, %v371, 0.0
      %v378 = vadd.f32 %v376, %v377
      %v379 = vrot.slane %v378, 4
      %v380 = vadd.f32 %v378, %v379
      %v381 = vrot.slane %v380, 2
      %v382 = vadd.f32 %v380, %v381
      %v383 = vrot.slane %v382, 1
      %v384 = vadd.f32 %v382, %v383
      %vm385 = vcmask 1040384
      %v386 = vsel %vm385, %v367, %v384
      %vm387 = vcmask 517120
      %388 = vst.msk [vmem:[%s230] sm:$0x3] %vm387, %v386
      %s389 = smul.u32 4, %s20
      %p390 = scmp.lt.s32.totalorder %s19, 1
      %s391 = scalar_select %p390, %s19, 1
      %p392 = scmp.lt.s32.totalorder %s389, 7
      %s393 = scalar_select %p392, %s389, 7
      %s394 = smul.addr %s391, 8
      %s395 = sadd.s32 %s393, %s394
      %s396 = smul.addr %s395, 4
      %s397 = scalar_lea.vmem %s2, %s396
      %p398 = scmp.lt.s32.totalorder %s19, 1
      %s399 = scalar_select %p398, %s19, 1
      %p400 = scmp.lt.s32.totalorder %s20, 1
      %s401 = scalar_select %p400, %s20, 1
      %s402 = smul.addr %s399, 2
      %s403 = sadd.s32 %s401, %s402
      %s404 = smul.addr %s403, 2
      %s405 = scalar_lea.vmem %s3, %s404
      // Predicated region
      $region29: #{downblock_forward.2} parent=27 // pred_check
        %p406 = pneg %p96
      $region30: #{downblock_forward.2} parent=27 // pred_check_branch
        %408 = sbr.rel (%p406) target = $region32
      $region31: #{downblock_forward.2} parent=27 // pred_region
        %s409 = smul.u32 4, %s20
      $region32: #{downblock_forward.2} parent=27 // pred_fallthru
        _
      // Predicated region
      $region33: #{downblock_forward.2} parent=27 // pred_check
        %p410 = pneg %p124
      $region34: #{downblock_forward.2} parent=27 // pred_check_branch
        %412 = sbr.rel (%p410) target = $region36
      $region35: #{downblock_forward.2} parent=27 // pred_region
        _
      $region36: #{downblock_forward.2} parent=27 // pred_fallthru
        _
    $region28: #{downblock_forward.2} parent=5 // pred_fallthru
      _
    %p413 = scmp.le.s32.totalorder 2, %s10
    // Predicated region
    $region37: #{downblock_forward.2} parent=5 // pred_check
      %p414 = pneg %p413
    $region38: #{downblock_forward.2} parent=5 // pred_check_branch
      %416 = sbr.rel (%p414) target = $region40
    $region39: #{downblock_forward.2} parent=5 // pred_region
      %s417 = ssub.s32 %s10, 2
      // Predicated region
      $region41: #{downblock_forward.2} parent=39 // pred_check
        %p418 = pneg %p102
      $region42: #{downblock_forward.2} parent=39 // pred_check_branch
        %420 = sbr.rel (%p418) target = $region44
      $region43: #{downblock_forward.2} parent=39 // pred_region
        %s421 = smul.u32 4, %s22
        %p422 = scmp.lt.s32.totalorder %s21, 1
        %s423 = scalar_select %p422, %s21, 1
        %p424 = scmp.lt.s32.totalorder %s421, 7
        %s425 = scalar_select %p424, %s421, 7
        %s426 = smul.addr %s423, 8
        %s427 = sadd.s32 %s425, %s426
        %s428 = smul.addr %s427, 4
        %s429 = scalar_lea.vmem %s2, %s428
      $region44: #{downblock_forward.2} parent=39 // pred_fallthru
        _
      // Predicated region
      $region45: #{downblock_forward.2} parent=39 // pred_check
        %p430 = pneg %p130
      $region46: #{downblock_forward.2} parent=39 // pred_check_branch
        %432 = sbr.rel (%p430) target = $region48
      $region47: #{downblock_forward.2} parent=39 // pred_region
        %p433 = scmp.lt.s32.totalorder %s21, 1
        %s434 = scalar_select %p433, %s21, 1
        %p435 = scmp.lt.s32.totalorder %s22, 1
        %s436 = scalar_select %p435, %s22, 1
        %s437 = smul.addr %s434, 2
        %s438 = sadd.s32 %s436, %s437
        %s439 = smul.addr %s438, 2
        %s440 = scalar_lea.vmem %s3, %s439
      $region48: #{downblock_forward.2} parent=39 // pred_fallthru
        _
    $region40: #{downblock_forward.2} parent=5 // pred_fallthru
      _
  $region6: #{downblock_forward.2} parent=0 // loop_footer
    %s14 = sadd.s32 1, %s10
  $region7: #{downblock_forward.2} parent=0 // loop_footer_branch
    %9 = sbr.rel target = $region3
  $region8: #{downblock_forward.2} parent=0 // loop_exit
    _

</llo_original>
